<compile_context>
chip_gen: v5e
topology: v5e:2x2
jax: 0.10.0
libtpu: 0.0.40
codegen_flags: <defaults>
</compile_context>

<pallas_src>
import functools

import jax
import jax.numpy as jnp
from jax.experimental import pallas as pl
from jax.experimental.pallas import tpu as pltpu

LEAKY_SLOPE = 0.2            # GATConv default negative_slope
BN_EPS = 1e-5
NEG = -1e30                  # masked-logit sentinel (applied in f32)
VMEM_LIMIT = 32 * 1024 * 1024   # portable scoped-VMEM ceiling (fits v7x's 64 MiB)

# Stage-2 tiles: mask tile = td*ts int8 = 512 KiB, batched-head f32 logit
# temporaries = heads*td*ts*4 ~= 4 MiB for heads=2 -> comfortably under the
# 32 MiB limit with double-buffered inputs.
TILE_DST = 512
TILE_SRC = 1024
TILE_ROW = 1024


def _pick_tile(n, target, align):
    """Largest t <= min(target, n) with t % align == 0 and n % t == 0, else n."""
    t = min(target, n)
    t -= t % align
    while t >= align:
        if n % t == 0:
            return t
        t -= align
    return n


def _pick_parallel_tile(n, target, align):
    """Like _pick_tile, but keep >= 2 tiles when possible so the 'parallel'
    grid axis can split across v7x's two TensorCores."""
    if n >= 2 * align:
        target = min(target, n // 2)
    return _pick_tile(n, target, align)


# ---------------------------------------------------------------------------
# Stage 1: one MXU matmul against the augmented weight
#   res = x @ [W | W@A_src | W@A_dst]   (bf16 inputs, f32 accumulation)
# sliced into head-major features h (bf16) and per-node logit halves.
# ---------------------------------------------------------------------------
def _project_kernel(x_ref, w_ref, h_ref, as_ref, ad_ref, *, heads, out_ch):
    x = x_ref[...].astype(jnp.bfloat16)                              # (tn, Cin)
    res = jnp.dot(x, w_ref[...], preferred_element_type=jnp.float32)  # (tn, H*OC+2H)
    hoc = heads * out_ch
    for hd in range(heads):                                          # head-major h
        h_ref[hd] = res[:, hd * out_ch:(hd + 1) * out_ch].astype(jnp.bfloat16)
    as_ref[...] = res[:, hoc:hoc + heads]                            # alpha_src
    ad_ref[...] = res[:, hoc + heads:hoc + 2 * heads]                # alpha_dst


# ---------------------------------------------------------------------------
# Stage 2: tiled masked attention, batched over heads, online softmax over
# source tiles, fused (bias + BatchNorm-eval + ELU) scale/shift epilogue.
# ---------------------------------------------------------------------------
def _attn_kernel(adst_ref, asrc_ref, h_ref, mask_ref, scale_ref, shift_ref,
                 o_ref, m_sc, l_sc, acc_sc, *, heads, concat, apply_elu):
    j = pl.program_id(1)

    @pl.when(j == 0)
    def _():
        m_sc[...] = jnp.full_like(m_sc, NEG)
        l_sc[...] = jnp.zeros_like(l_sc)
        acc_sc[...] = jnp.zeros_like(acc_sc)

    # Mask handling hoisted out of the head dimension: one compare + one
    # select per (dst, src) tile, shared by all heads.
    valid = mask_ref[...] > 0                          # (td, ts), int8 input
    mask_f = valid.astype(jnp.float32)
    neg_bias = jnp.where(valid, 0.0, NEG)              # (td, ts) f32

    a_dst = adst_ref[...]                              # (H, td, 1)  f32
    a_src = asrc_ref[...]                              # (H, 1, ts)  f32
    z = a_dst + a_src                                  # (H, td, ts)
    z = jnp.maximum(z, LEAKY_SLOPE * z)                # leaky_relu
    z = z + neg_bias[None, :, :]

    m_prev = m_sc[...]                                 # (H, td, 1)
    m_new = jnp.maximum(m_prev, jnp.max(z, axis=-1, keepdims=True))
    corr = jnp.exp(m_prev - m_new)
    # Explicitly zero masked probabilities: correctness for all-masked tiles
    # does not rely on exp underflow, and garbage never enters l/acc.
    p = jnp.exp(z - m_new) * mask_f[None, :, :]        # (H, td, ts)

    l_sc[...] = corr * l_sc[...] + jnp.sum(p, axis=-1, keepdims=True)
    acc_sc[...] = corr * acc_sc[...] + jnp.einsum(
        'hts,hsd->htd', p.astype(jnp.bfloat16), h_ref[...],
        preferred_element_type=jnp.float32)
    m_sc[...] = m_new

    @pl.when(j == pl.num_programs(1) - 1)
    def _():
        inv = pl.reciprocal(jnp.maximum(l_sc[...], 1e-20), approx=True)
        norm = acc_sc[...] * inv                       # (H, td, OC) f32
        if concat:
            # head-major output block; the wrapper reshapes to (N, H*OC).
            out = norm * scale_ref[...] + shift_ref[...]        # (H,1,OC) bcast
        else:
            out = norm[0]
            for hd in range(1, heads):
                out = out + norm[hd]
            out = out * (1.0 / heads)
            out = out * scale_ref[...] + shift_ref[...]         # (1, OC) bcast
        if apply_elu:
            out = jnp.where(out > 0, out, jnp.exp(jnp.minimum(out, 0.0)) - 1.0)
        # TODO(synk): out_ch < 128 means this once-per-dst-tile store is still a
        # masked partial store; lane-padding the output slab to 128 would make
        # it a full vst (mainly relevant on v5e's single store slot).
        o_ref[...] = out.astype(o_ref.dtype)


def _augment_weight(w, att_src, att_dst, heads, out_ch):
    """W_aug = [W | W@A_src | W@A_dst]; A_* is the block-diagonal stack of the
    per-head attention vectors, so x@W_aug yields h and both logit halves."""
    cin = w.shape[0]
    w3 = w.reshape(cin, heads, out_ch)
    w_as = jnp.einsum('chk,hk->ch', w3, att_src)       # (cin, heads)
    w_ad = jnp.einsum('chk,hk->ch', w3, att_dst)       # (cin, heads)
    return jnp.concatenate([w, w_as, w_ad], axis=1)    # (cin, H*OC + 2H)


def gat_layer(x, w_aug, mask, eff_scale, eff_shift, *,
              heads, out_ch, concat, apply_elu, out_dtype):
    n, cin = x.shape
    hoc = heads * out_ch
    waug_cols = hoc + 2 * heads

    # ---- stage 1: fused projection + attention-logit halves ----------------
    tn = _pick_parallel_tile(n, TILE_ROW, 16)          # 16: bf16 sublane packing
    proj = functools.partial(_project_kernel, heads=heads, out_ch=out_ch)
    h, a_src, a_dst = pl.pallas_call(
        proj,
        grid=(n // tn,),
        in_specs=[pl.BlockSpec((tn, cin), lambda i: (i, 0)),
                  pl.BlockSpec((cin, waug_cols), lambda i: (0, 0))],
        out_specs=[pl.BlockSpec((heads, tn, out_ch), lambda i: (0, i, 0)),
                   pl.BlockSpec((tn, heads), lambda i: (i, 0)),
                   pl.BlockSpec((tn, heads), lambda i: (i, 0))],
        out_shape=[jax.ShapeDtypeStruct((heads, n, out_ch), jnp.bfloat16),
                   jax.ShapeDtypeStruct((n, heads), jnp.float32),
                   jax.ShapeDtypeStruct((n, heads), jnp.float32)],
        compiler_params=pltpu.CompilerParams(
            dimension_semantics=("parallel",),
            vmem_limit_bytes=VMEM_LIMIT),
    )(x, w_aug.astype(jnp.bfloat16))

    # Tiny (N, heads) tables reshaped once in the wrapper so the kernel can
    # broadcast dst logits along lanes and src logits along sublanes directly.
    a_src3 = a_src.T.reshape(heads, 1, n)
    a_dst3 = a_dst.T.reshape(heads, n, 1)

    # ---- stage 2: tiled masked attention ------------------------------------
    td = _pick_parallel_tile(n, TILE_DST, 32)          # 32: int8 mask sublane tile
    ts = _pick_tile(n, TILE_SRC, 128)                  # 128: mask lane tile

    if concat:
        scale_k = eff_scale.reshape(heads, 1, out_ch)
        shift_k = eff_shift.reshape(heads, 1, out_ch)
        scale_spec = pl.BlockSpec((heads, 1, out_ch), lambda i, j: (0, 0, 0))
        out_spec = pl.BlockSpec((heads, td, out_ch), lambda i, j: (0, i, 0))
        out_shape = jax.ShapeDtypeStruct((heads, n, out_ch), out_dtype)
    else:
        scale_k, shift_k = eff_scale, eff_shift        # (1, out_ch)
        scale_spec = pl.BlockSpec((1, out_ch), lambda i, j: (0, 0))
        out_spec = pl.BlockSpec((td, out_ch), lambda i, j: (i, 0))
        out_shape = jax.ShapeDtypeStruct((n, out_ch), out_dtype)

    # TODO(synk): for sparse/structured adjacencies, a per-tile occupancy table
    # via PrefetchScalarGridSpec could skip all-masked src tiles entirely.
    # TODO(synk): if the mask DMA shows up exposed in a trace (most likely on
    # v5e), add pipeline_mode=pl.Buffered(3) on the mask/h BlockSpecs.
    attn = functools.partial(_attn_kernel, heads=heads, concat=concat,
                             apply_elu=apply_elu)
    out = pl.pallas_call(
        attn,
        grid=(n // td, n // ts),
        in_specs=[pl.BlockSpec((heads, td, 1), lambda i, j: (0, i, 0)),  # alpha_dst
                  pl.BlockSpec((heads, 1, ts), lambda i, j: (0, 0, j)),  # alpha_src
                  pl.BlockSpec((heads, ts, out_ch), lambda i, j: (0, j, 0)),  # h bf16
                  pl.BlockSpec((td, ts), lambda i, j: (i, j)),           # mask int8
                  scale_spec,                                            # eff. scale
                  scale_spec],                                           # eff. shift
        out_specs=out_spec,
        out_shape=out_shape,
        scratch_shapes=[pltpu.VMEM((heads, td, 1), jnp.float32),   # running max
                        pltpu.VMEM((heads, td, 1), jnp.float32),   # running denom
                        pltpu.VMEM((heads, td, out_ch), jnp.float32)],  # accumulator
        compiler_params=pltpu.CompilerParams(
            dimension_semantics=("parallel", "arbitrary"),
            vmem_limit_bytes=VMEM_LIMIT),
    )(a_dst3, a_src3, h, mask, scale_k, shift_k)

    if concat:
        # head-major (H, N, OC) -> node-major (N, H*OC); tiny XLA reshape.
        out = out.transpose(1, 0, 2).reshape(n, hoc)
    return out


# ---------------------------------------------------------------------------
# Parameter construction (deterministic, glorot-style) and full forward.
# ---------------------------------------------------------------------------
def glorot(key, shape):
    fan_in, fan_out = shape[-2], shape[-1]
    limit = (6.0 / (fan_in + fan_out)) ** 0.5
    return jax.random.uniform(key, shape, jnp.float32, -limit, limit)


def init_params(key, in_ch, hidden_ch, out_ch, heads, out_heads):
    ks = jax.random.split(key, 6)
    p = {}
    # conv0: GATConv(in_ch -> hidden_ch, heads, concat=True)
    p["w0"] = glorot(ks[0], (in_ch, heads * hidden_ch))
    p["asrc0"] = glorot(ks[1], (heads, hidden_ch))
    p["adst0"] = glorot(ks[2], (heads, hidden_ch))
    p["b0"] = jnp.zeros((1, heads * hidden_ch), jnp.float32)
    # bn0: BatchNorm1d(hidden_ch*heads), PyTorch defaults, eval mode
    c = heads * hidden_ch
    p["bn0_gamma"] = jnp.ones((1, c), jnp.float32)
    p["bn0_beta"] = jnp.zeros((1, c), jnp.float32)
    p["bn0_mean"] = jnp.zeros((1, c), jnp.float32)
    p["bn0_var"] = jnp.ones((1, c), jnp.float32)
    # conv1: GATConv(hidden_ch*heads -> out_ch, out_heads, concat=False)
    p["w1"] = glorot(ks[3], (heads * hidden_ch, out_heads * out_ch))
    p["asrc1"] = glorot(ks[4], (out_heads, out_ch))
    p["adst1"] = glorot(ks[5], (out_heads, out_ch))
    p["b1"] = jnp.zeros((1, out_ch), jnp.float32)
    return p


def gat_forward(data, params, mask, *, hidden_ch, out_ch, heads, out_heads):
    # TODO(synk): dropout is identity here (eval mode); training-mode dropout
    # would need pltpu.prng_* inside the kernels.
    b, s, cin = data.shape
    x = data.reshape(b * s, cin).astype(jnp.float32)

    # conv0 with fused bias + BatchNorm(eval) + ELU:
    #   y = ((agg + bias) - mean) * gamma / sqrt(var + eps) + beta
    #     = agg * scale + (bias * scale + beta - mean * scale)
    scale0 = params["bn0_gamma"] * jax.lax.rsqrt(params["bn0_var"] + BN_EPS)
    shift0 = (params["b0"] * scale0 + params["bn0_beta"]
              - params["bn0_mean"] * scale0)
    w0_aug = _augment_weight(params["w0"], params["asrc0"], params["adst0"],
                             heads, hidden_ch)
    x = gat_layer(x, w0_aug, mask, scale0, shift0,
                  heads=heads, out_ch=hidden_ch, concat=True, apply_elu=True,
                  out_dtype=jnp.bfloat16)   # bf16 intermediate: re-cast anyway

    # conv1: heads averaged (concat=False); bias only, no BN/ELU.
    scale1 = jnp.ones((1, out_ch), jnp.float32)
    shift1 = params["b1"]
    w1_aug = _augment_weight(params["w1"], params["asrc1"], params["adst1"],
                             out_heads, out_ch)
    x = gat_layer(x, w1_aug, mask, scale1, shift1,
                  heads=out_heads, out_ch=out_ch, concat=False, apply_elu=False,
                  out_dtype=jnp.float32)
    return x.reshape(b, s, -1)


if __name__ == "__main__":
    # Small shapes consistent with the module's forward.
    batch, seq, in_ch = 2, 8, 4
    hidden_ch, out_ch = 8, 4
    heads, out_heads = 2, 1
    n = batch * seq

    key = jax.random.PRNGKey(0)
    k_data, k_adj, k_param = jax.random.split(key, 3)

    data = jax.random.normal(k_data, (batch, seq, in_ch), jnp.float32)

    # Deterministic synthetic adjacency over the N flattened nodes
    # (plays the role of `self.adj`; edge_index = adj.nonzero()).
    adj = (jax.random.uniform(k_adj, (n, n)) < 0.3).astype(jnp.float32)
    # mask[i, j] = 1 iff edge j -> i exists (adj[j, i] != 0) or i == j
    # (GATConv's default add_self_loops=True).  Stored in int8 to halve the
    # N x N HBM/VMEM stream; masking is applied to f32 logits in-kernel.
    mask = ((adj.T + jnp.eye(n, dtype=jnp.float32)) > 0).astype(jnp.int8)

    params = init_params(k_param, in_ch, hidden_ch, out_ch, heads, out_heads)

    out = gat_forward(data, params, mask, hidden_ch=hidden_ch, out_ch=out_ch,
                      heads=heads, out_heads=out_heads)
    out = jax.block_until_ready(out)
    assert out.shape == (batch, seq, out_ch), out.shape
    assert bool(jnp.all(jnp.isfinite(out)))
    print("KERNEL_OK")
</pallas_src>

<mosaic_0001>
module attributes {stable_mosaic.version = 11 : i64} {
  func.func @_project_kernel(%arg0: i32, %arg1: memref<16x4xf32, #tpu.memory_space<vmem>>, %arg2: memref<4x20xbf16, #tpu.memory_space<vmem>>, %arg3: memref<2x16x8xbf16, #tpu.memory_space<vmem>>, %arg4: memref<16x2xf32, #tpu.memory_space<vmem>>, %arg5: memref<16x2xf32, #tpu.memory_space<vmem>>) attributes {dimension_semantics = [#tpu.dimension_semantics<parallel>], iteration_bounds = array<i64: 1>, scalar_prefetch = 0 : i64, scratch_operands = 0 : i64, tpu.core_type = #tpu.core_type<tc>, window_params = [{transform_indices = @transform_0, window_bounds = array<i64: 16, 4>}, {pipeline_mode = #tpu.pipeline_mode<synchronous>, transform_indices = @transform_1, window_bounds = array<i64: 4, 20>}, {transform_indices = @transform_2, window_bounds = array<i64: 2, 16, 8>}, {transform_indices = @transform_3, window_bounds = array<i64: 16, 2>}, {transform_indices = @transform_4, window_bounds = array<i64: 16, 2>}]} {
    %c0 = arith.constant 0 : index
    %c0_0 = arith.constant 0 : index
    %0 = vector.load %arg1[%c0, %c0_0] : memref<16x4xf32, #tpu.memory_space<vmem>>, vector<16x4xf32>
    %1 = arith.truncf %0 : vector<16x4xf32> to vector<16x4xbf16>
    %c0_1 = arith.constant 0 : index
    %c0_2 = arith.constant 0 : index
    %2 = vector.load %arg2[%c0_1, %c0_2] : memref<4x20xbf16, #tpu.memory_space<vmem>>, vector<4x20xbf16>
    %cst = arith.constant dense<0.000000e+00> : vector<16x20xf32>
    %3 = tpu.matmul %1, %2, %cst {dimension_numbers = #tpu.dot_dimension_numbers<[1], [0], [0], [1], [0, 0, 1, 1], [], []>} : vector<16x4xbf16>, vector<4x20xbf16>, vector<16x20xf32> -> vector<16x20xf32>
    %4 = vector.extract_strided_slice %3 {offsets = [0, 0], sizes = [16, 8], strides = [1, 1]} : vector<16x20xf32> to vector<16x8xf32>
    %5 = arith.truncf %4 : vector<16x8xf32> to vector<16x8xbf16>
    %c0_3 = arith.constant 0 : index
    %c0_4 = arith.constant 0 : index
    %c0_5 = arith.constant 0 : index
    %6 = vector.load %arg3[%c0_3, %c0_4, %c0_5] : memref<2x16x8xbf16, #tpu.memory_space<vmem>>, vector<1x16x8xbf16>
    %7 = vector.shape_cast %6 : vector<1x16x8xbf16> to vector<16x8xbf16>
    %8 = vector.shape_cast %5 : vector<16x8xbf16> to vector<1x16x8xbf16>
    tpu.vector_store %arg3[%c0_3, %c0_4, %c0_5], %8 {strides = array<i32>} : memref<2x16x8xbf16, #tpu.memory_space<vmem>>, vector<1x16x8xbf16>,
    %9 = vector.extract_strided_slice %3 {offsets = [0, 8], sizes = [16, 8], strides = [1, 1]} : vector<16x20xf32> to vector<16x8xf32>
    %10 = arith.truncf %9 : vector<16x8xf32> to vector<16x8xbf16>
    %c1 = arith.constant 1 : index
    %c0_6 = arith.constant 0 : index
    %c0_7 = arith.constant 0 : index
    %11 = vector.load %arg3[%c1, %c0_6, %c0_7] : memref<2x16x8xbf16, #tpu.memory_space<vmem>>, vector<1x16x8xbf16>
    %12 = vector.shape_cast %11 : vector<1x16x8xbf16> to vector<16x8xbf16>
    %13 = vector.shape_cast %10 : vector<16x8xbf16> to vector<1x16x8xbf16>
    tpu.vector_store %arg3[%c1, %c0_6, %c0_7], %13 {strides = array<i32>} : memref<2x16x8xbf16, #tpu.memory_space<vmem>>, vector<1x16x8xbf16>,
    %14 = vector.extract_strided_slice %3 {offsets = [0, 16], sizes = [16, 2], strides = [1, 1]} : vector<16x20xf32> to vector<16x2xf32>
    %c0_8 = arith.constant 0 : index
    %c0_9 = arith.constant 0 : index
    %15 = vector.load %arg4[%c0_8, %c0_9] : memref<16x2xf32, #tpu.memory_space<vmem>>, vector<16x2xf32>
    tpu.vector_store %arg4[%c0_8, %c0_9], %14 {strides = array<i32>} : memref<16x2xf32, #tpu.memory_space<vmem>>, vector<16x2xf32>,
    %16 = vector.extract_strided_slice %3 {offsets = [0, 18], sizes = [16, 2], strides = [1, 1]} : vector<16x20xf32> to vector<16x2xf32>
    %c0_10 = arith.constant 0 : index
    %c0_11 = arith.constant 0 : index
    %17 = vector.load %arg5[%c0_10, %c0_11] : memref<16x2xf32, #tpu.memory_space<vmem>>, vector<16x2xf32>
    tpu.vector_store %arg5[%c0_10, %c0_11], %16 {strides = array<i32>} : memref<16x2xf32, #tpu.memory_space<vmem>>, vector<16x2xf32>,
    return
  }
  func.func @transform_0(%arg0: i32) -> (i32, i32) {
    %c0_i32 = arith.constant 0 : i32
    %c0_i32_0 = arith.constant 0 : i32
    return %arg0, %c0_i32 : i32, i32
  }
  func.func @transform_1(%arg0: i32) -> (i32, i32) {
    %c0_i32 = arith.constant 0 : i32
    %c0_i32_0 = arith.constant 0 : i32
    %c0_i32_1 = arith.constant 0 : i32
    return %c0_i32, %c0_i32_0 : i32, i32
  }
  func.func @transform_2(%arg0: i32) -> (i32, i32, i32) {
    %c0_i32 = arith.constant 0 : i32
    %c0_i32_0 = arith.constant 0 : i32
    %c0_i32_1 = arith.constant 0 : i32
    return %c0_i32, %arg0, %c0_i32_0 : i32, i32, i32
  }
  func.func @transform_3(%arg0: i32) -> (i32, i32) {
    %c0_i32 = arith.constant 0 : i32
    %c0_i32_0 = arith.constant 0 : i32
    return %arg0, %c0_i32 : i32, i32
  }
  func.func @transform_4(%arg0: i32) -> (i32, i32) {
    %c0_i32 = arith.constant 0 : i32
    %c0_i32_0 = arith.constant 0 : i32
    return %arg0, %c0_i32 : i32, i32
  }
}

</mosaic_0001>

<llo_original>
// kernel: tpu_custom_call.1
$region0: #{tpu_custom_call.1}
  #allocation0 [shape = 'u32[]', space=smem, size = 0x4, offset = 0x4, fixed_abs, tag = 'smem constant byte address 0x4 - core index']
  #allocation1 [shape = 'u32[72,128]{1,0:T(1,128)}', space=vmem, size = 0x9000, scoped, tag = 'internal scratch']
  %s0 = inlined_call_operand.vmem [shape: f32[16,4], index: 0, kind: input, shape index: {}]
  %s1 = inlined_call_operand.vmem [shape: bf16[4,20], index: 1, kind: input, shape index: {}]
  %s2 = inlined_call_operand.vmem [shape: bf16[2,16,8], index: 2, kind: output, shape index: {0}]
  %s3 = inlined_call_operand.vmem [shape: f32[16,2], index: 3, kind: output, shape index: {1}]
  %s4 = inlined_call_operand.vmem [shape: f32[16,2], index: 4, kind: output, shape index: {2}]
  %5 = xla_tuple %s2, %s3, %s4
  %s6 = sld [smem:[#allocation0]]
  $region34: #{tpu_custom_call.1} parent=0
    _
  %s8 = ssub.s32 1, %s6
  %s9 = scalar_select 0, %s8, %s6
  // Predicated region
  $region2: #{tpu_custom_call.1} parent=0 // pred_check
    _
  $region3: #{tpu_custom_call.1} parent=0 // pred_check_branch
    %11 = sbr.rel (0) target = $region5
  $region4: #{tpu_custom_call.1} parent=0 // pred_region
    _
  $region5: #{tpu_custom_call.1} parent=0 // pred_fallthru
    _
  // Predicated region
  $region6: #{tpu_custom_call.1} parent=0 // pred_check
    _
  $region7: #{tpu_custom_call.1} parent=0 // pred_check_branch
    %13 = sbr.rel (0) target = $region9
  $region8: #{tpu_custom_call.1} parent=0 // pred_region
    _
  $region9: #{tpu_custom_call.1} parent=0 // pred_fallthru
    _
  %v15 = vld [vmem:[%s0] sm:$0xff]
  %v16 = vld [vmem:[%s0 + $0x8] sm:$0xff]
  %v17 = vpack.c.bf16 %v16, %v15
  %v18 = vld [vmem:[%s1] sm:$0x3]
  %vm19 = vcmask 31744
  %v21 = vsel %vm19, %v17, 0
  %vm23 = vcmask 1041408
  %v25 = vsel %vm23, %v18, 0
  %27 = vmatpush.bf16.msra.mxu0 0
  %28 = vmatpush.bf16.msra.mxu0 0
  %29 = vmatpush.bf16.msra.mxu0 0
  %30 = vmatpush.bf16.msra.mxu0 0
  %31 = vmatpush.bf16.msra.mxu0 0
  %32 = vmatpush.bf16.msra.mxu0 0
  %33 = vmatpush.bf16.msra.mxu0 0
  %34 = vmatpush.bf16.msra.mxu0 %v25
  %35 = vmatmul.bf16.gmra.mxu0 %v21
  %v36 = vpop.f32.mrf.mxu0
  %v37 = vadd.f32 0.0, %v36
  %v38 = vpop.f32.mrf.mxu0
  %v39 = vadd.f32 0.0, %v38
  %40 = vdwg.mxu0
  %v41 = vpack.c.bf16 %v37, %v37
  %v42 = vpack.c.bf16 %v39, %v39
  %vm43 = vcmask 60416
  %44 = vst.msk [vmem:[%s2] sm:$0xf] %vm43, %v41
  %45 = vst.msk [vmem:[%s2 + $0x4] sm:$0xf] %vm43, %v42
  %48 = vrot.lane.b32.xlu0 %v41, 120
  %v49 = vpop.permute.xlu0 %48
  %50 = vrot.lane.b32.xlu0 %v42, 120
  %v51 = vpop.permute.xlu0 %50
  %s54 = scalar_lea.vmem %s2, 8
  %55 = vst.msk [vmem:[%s54] sm:$0xf] %vm43, %v49
  %56 = vst.msk [vmem:[%s54 + $0x4] sm:$0xf] %vm43, %v51
  %59 = vrot.lane.b32.xlu0 %v37, 112
  %v60 = vpop.permute.xlu0 %59
  %61 = vrot.lane.b32.xlu0 %v39, 112
  %v62 = vpop.permute.xlu0 %61
  %vm65 = vcmask 15360
  %66 = vst.msk [vmem:[%s3] sm:$0xff] %vm65, %v60
  %67 = vst.msk [vmem:[%s3 + $0x8] sm:$0xff] %vm65, %v62
  %68 = vrot.lane.b32.xlu0 %v37, 110
  %v69 = vpop.permute.xlu0 %68
  %70 = vrot.lane.b32.xlu0 %v39, 110
  %v71 = vpop.permute.xlu0 %70
  %74 = vst.msk [vmem:[%s4] sm:$0xff] %vm65, %v69
  %75 = vst.msk [vmem:[%s4 + $0x8] sm:$0xff] %vm65, %v71
  // Predicated region
  $region10: #{tpu_custom_call.1} parent=0 // pred_check
    _
  $region11: #{tpu_custom_call.1} parent=0 // pred_check_branch
    %77 = sbr.rel (0) target = $region13
  $region12: #{tpu_custom_call.1} parent=0 // pred_region
    _
  $region13: #{tpu_custom_call.1} parent=0 // pred_fallthru
    _
  // Predicated region
  $region14: #{tpu_custom_call.1} parent=0 // pred_check
    _
  $region15: #{tpu_custom_call.1} parent=0 // pred_check_branch
    %79 = sbr.rel (0) target = $region17
  $region16: #{tpu_custom_call.1} parent=0 // pred_region
    _
  $region17: #{tpu_custom_call.1} parent=0 // pred_fallthru
    _
  // Predicated region
  $region18: #{tpu_custom_call.1} parent=0 // pred_check
    _
  $region19: #{tpu_custom_call.1} parent=0 // pred_check_branch
    %81 = sbr.rel (0) target = $region21
  $region20: #{tpu_custom_call.1} parent=0 // pred_region
    _
  $region21: #{tpu_custom_call.1} parent=0 // pred_fallthru
    _
  // Predicated region
  $region22: #{tpu_custom_call.1} parent=0 // pred_check
    _
  $region23: #{tpu_custom_call.1} parent=0 // pred_check_branch
    %83 = sbr.rel (0) target = $region25
  $region24: #{tpu_custom_call.1} parent=0 // pred_region
    _
  $region25: #{tpu_custom_call.1} parent=0 // pred_fallthru
    _
  // Predicated region
  $region26: #{tpu_custom_call.1} parent=0 // pred_check
    _
  $region27: #{tpu_custom_call.1} parent=0 // pred_check_branch
    %85 = sbr.rel (0) target = $region29
  $region28: #{tpu_custom_call.1} parent=0 // pred_region
    _
  $region29: #{tpu_custom_call.1} parent=0 // pred_fallthru
    _
  // Predicated region
  $region30: #{tpu_custom_call.1} parent=0 // pred_check
    _
  $region31: #{tpu_custom_call.1} parent=0 // pred_check_branch
    %87 = sbr.rel (0) target = $region33
  $region32: #{tpu_custom_call.1} parent=0 // pred_region
    _
  $region33: #{tpu_custom_call.1} parent=0 // pred_fallthru
    _

</llo_original>
